<compile_context>
chip_gen: v5e
topology: v5e:2x2
jax: 0.10.0
libtpu: 0.0.40
codegen_flags: <defaults>
</compile_context>

<pallas_src>
import jax
import jax.numpy as jnp
from jax.experimental import pallas as pl
from jax.experimental.pallas import tpu as pltpu


def _linear_kernel(x_ref, wt_ref, b_ref, o_ref):
    # x_ref : (TB, F)   current batch tile
    # wt_ref: (F, C)    pre-transposed weight (resident across all tiles)
    # b_ref : (1, C)    bias row
    # o_ref : (TB, C)   output tile
    acc = jnp.dot(x_ref[...], wt_ref[...],
                  preferred_element_type=jnp.float32)     # MXU, f32 accumulate
    o_ref[...] = (acc + b_ref[...]).astype(o_ref.dtype)   # VPU bias epilogue


def prepare_linear_params(weight, bias):
    """One-time layout prep (per parameter update, NOT per forward call):
    nn.Linear stores W as (C, F); the kernel wants (F, C) so the MXU contracts
    on F directly with no in-kernel transpose."""
    return weight.T, bias.reshape(1, -1)


def _choose_batch_tile(B, F, C):
    """Pick a batch tile so each step moves MiBs, not KiBs (x tile ~4 MiB)."""
    bytes_per_row = 4 * (F + C)                 # f32 x row + out row
    tb = (4 << 20) // max(bytes_per_row, 1)
    tb = max(512, min(tb, 32768))
    if tb >= B:
        return B                                 # single block == full dim (legal)
    if B < 2 * tb:
        # Keep >= 2 grid steps so v7x's two TensorCores both get work.
        tb = pl.cdiv(B, 2)
    tb = max(8, (tb // 8) * 8)                   # sublane grain
    return tb


def linear_forward(x, weight_t, bias_row, *, block_rows=None):
    """y = x @ weight_t + bias_row, with weight_t = W.T (from prepare_linear_params)."""
    B, F = x.shape
    F2, C = weight_t.shape
    assert F == F2, "weight in_features mismatch"
    assert bias_row.shape == (1, C)

    TB = _choose_batch_tile(B, F, C) if block_rows is None else min(block_rows, B)
    grid = (pl.cdiv(B, TB),)

    # VMEM budget: double-buffered x & out tiles + (double-buffered) weight/bias.
    itemsize = 4
    vmem_needed = 2 * TB * (F + C) * itemsize + 2 * (F * C + C) * itemsize
    vmem_limit = min(max(vmem_needed + (4 << 20), 16 << 20), 128 << 20)

    return pl.pallas_call(
        _linear_kernel,
        out_shape=jax.ShapeDtypeStruct((B, C), x.dtype),
        grid_spec=pltpu.PrefetchScalarGridSpec(
            num_scalar_prefetch=0,
            grid=grid,
            in_specs=[
                pl.BlockSpec((TB, F), lambda i: (i, 0)),   # x: tiled on batch
                pl.BlockSpec((F, C), lambda i: (0, 0)),    # W^T: replicated/resident
                pl.BlockSpec((1, C), lambda i: (0, 0)),    # bias: replicated/resident
            ],
            out_specs=pl.BlockSpec((TB, C), lambda i: (i, 0)),
        ),
        compiler_params=pltpu.CompilerParams(
            # Batch tiles are independent -> megacore-shardable on v7x.
            dimension_semantics=("parallel",),
            vmem_limit_bytes=vmem_limit,
        ),
    )(x, weight_t, bias_row)


def logistic_regression_multiclass(x, weight, bias, *, block_rows=None):
    """Convenience one-shot API matching the PyTorch module's forward.
    For repeated calls with fixed parameters, call prepare_linear_params once
    and use linear_forward directly (avoids a per-call transpose)."""
    wt, b2 = prepare_linear_params(weight, bias)
    return linear_forward(x, wt, b2, block_rows=block_rows)


if __name__ == "__main__":
    # Shapes implied by the module: x (batch, in_features) -> (batch, num_classes)
    batch, in_features, num_classes = 8, 32, 10

    key = jax.random.PRNGKey(0)
    kx, kw, kb = jax.random.split(key, 3)

    # Deterministic parameter init mimicking nn.Linear's U(-1/sqrt(F), 1/sqrt(F)).
    bound = 1.0 / (in_features ** 0.5)
    x = jax.random.normal(kx, (batch, in_features), dtype=jnp.float32)
    weight = jax.random.uniform(kw, (num_classes, in_features),
                                dtype=jnp.float32, minval=-bound, maxval=bound)
    bias = jax.random.uniform(kb, (num_classes,),
                              dtype=jnp.float32, minval=-bound, maxval=bound)

    # Parameter layout prep done ONCE (not per forward call).
    wt, b2 = prepare_linear_params(weight, bias)

    out = linear_forward(x, wt, b2)
    out = jax.block_until_ready(out)

    ref = x @ weight.T + bias
    assert out.shape == (batch, num_classes)
    assert jnp.allclose(out, ref, atol=1e-5, rtol=1e-5)

    # Also exercise the multi-tile path with a ragged last block (grid = 4,
    # final block only 4 valid rows) using a small forced tile size.
    x2 = jax.random.normal(kx, (100, in_features), dtype=jnp.float32)
    out2 = jax.block_until_ready(linear_forward(x2, wt, b2, block_rows=32))
    ref2 = x2 @ weight.T + bias
    assert out2.shape == (100, num_classes)
    assert jnp.allclose(out2, ref2, atol=1e-5, rtol=1e-5)

    print("KERNEL_OK")
</pallas_src>

<mosaic_0001>
module attributes {stable_mosaic.version = 11 : i64} {
  func.func @_linear_kernel(%arg0: i32, %arg1: memref<8x32xf32, #tpu.memory_space<vmem>>, %arg2: memref<32x10xf32, #tpu.memory_space<vmem>>, %arg3: memref<1x10xf32, #tpu.memory_space<vmem>>, %arg4: memref<8x10xf32, #tpu.memory_space<vmem>>) attributes {dimension_semantics = [#tpu.dimension_semantics<parallel>], iteration_bounds = array<i64: 1>, scalar_prefetch = 0 : i64, scratch_operands = 0 : i64, tpu.core_type = #tpu.core_type<tc>, window_params = [{transform_indices = @transform_0, window_bounds = array<i64: 8, 32>}, {pipeline_mode = #tpu.pipeline_mode<synchronous>, transform_indices = @transform_1, window_bounds = array<i64: 32, 10>}, {pipeline_mode = #tpu.pipeline_mode<synchronous>, transform_indices = @transform_2, window_bounds = array<i64: 1, 10>}, {transform_indices = @transform_3, window_bounds = array<i64: 8, 10>}]} {
    %c0 = arith.constant 0 : index
    %c0_0 = arith.constant 0 : index
    %0 = vector.load %arg1[%c0, %c0_0] : memref<8x32xf32, #tpu.memory_space<vmem>>, vector<8x32xf32>
    %c0_1 = arith.constant 0 : index
    %c0_2 = arith.constant 0 : index
    %1 = vector.load %arg2[%c0_1, %c0_2] : memref<32x10xf32, #tpu.memory_space<vmem>>, vector<32x10xf32>
    %cst = arith.constant dense<0.000000e+00> : vector<8x10xf32>
    %2 = tpu.matmul %0, %1, %cst {dimension_numbers = #tpu.dot_dimension_numbers<[1], [0], [0], [1], [0, 0, 1, 1], [], []>} : vector<8x32xf32>, vector<32x10xf32>, vector<8x10xf32> -> vector<8x10xf32>
    %c0_3 = arith.constant 0 : index
    %c0_4 = arith.constant 0 : index
    %3 = vector.load %arg3[%c0_3, %c0_4] : memref<1x10xf32, #tpu.memory_space<vmem>>, vector<1x10xf32>
    %4 = vector.broadcast %3 : vector<1x10xf32> to vector<8x10xf32>
    %5 = arith.addf %2, %4 : vector<8x10xf32>
    %c0_5 = arith.constant 0 : index
    %c0_6 = arith.constant 0 : index
    %6 = vector.load %arg4[%c0_5, %c0_6] : memref<8x10xf32, #tpu.memory_space<vmem>>, vector<8x10xf32>
    tpu.vector_store %arg4[%c0_5, %c0_6], %5 {strides = array<i32>} : memref<8x10xf32, #tpu.memory_space<vmem>>, vector<8x10xf32>,
    return
  }
  func.func @transform_0(%arg0: i32) -> (i32, i32) {
    %c0_i32 = arith.constant 0 : i32
    %c0_i32_0 = arith.constant 0 : i32
    return %arg0, %c0_i32 : i32, i32
  }
  func.func @transform_1(%arg0: i32) -> (i32, i32) {
    %c0_i32 = arith.constant 0 : i32
    %c0_i32_0 = arith.constant 0 : i32
    %c0_i32_1 = arith.constant 0 : i32
    return %c0_i32, %c0_i32_0 : i32, i32
  }
  func.func @transform_2(%arg0: i32) -> (i32, i32) {
    %c0_i32 = arith.constant 0 : i32
    %c0_i32_0 = arith.constant 0 : i32
    %c0_i32_1 = arith.constant 0 : i32
    return %c0_i32, %c0_i32_0 : i32, i32
  }
  func.func @transform_3(%arg0: i32) -> (i32, i32) {
    %c0_i32 = arith.constant 0 : i32
    %c0_i32_0 = arith.constant 0 : i32
    return %arg0, %c0_i32 : i32, i32
  }
}

</mosaic_0001>

<llo_original>
// kernel: tpu_custom_call.1
$region0: #{tpu_custom_call.1}
  #allocation0 [shape = 'u32[]', space=smem, size = 0x4, offset = 0x4, fixed_abs, tag = 'smem constant byte address 0x4 - core index']
  #allocation1 [shape = 'u32[72,128]{1,0:T(1,128)}', space=vmem, size = 0x9000, scoped, tag = 'internal scratch']
  %s0 = inlined_call_operand.vmem [shape: f32[8,32], index: 0, kind: input, shape index: {}]
  %s1 = inlined_call_operand.vmem [shape: f32[32,10], index: 1, kind: input, shape index: {}]
  %s2 = inlined_call_operand.vmem [shape: f32[1,10], index: 2, kind: input, shape index: {}]
  %s3 = inlined_call_operand.hbm [shape: f32[8,10], index: 3, kind: output, shape index: {}]
  %s4 = sld [smem:[#allocation0]]
  $region22: #{tpu_custom_call.1} parent=0
    _
  %s6 = ssub.s32 1, %s4
  %s7 = scalar_select 0, %s6, %s4
  $region1: #{tpu_custom_call.1} parent=0
    #allocation2 [shape = 'u8[4096]{0}', space=vmem, size = 0x1000, scoped, tag = 'output window, operand 0, single buffered']
    #allocation3 [shape = 's32[1]{0}', space=sflag, size = 0x4, scoped, tag = 'scoped memory for tpu_custom_call.1']
    %8 = vsyncpa [#allocation3], 0
    // Predicated region
    $region2: #{tpu_custom_call.1} parent=1 // pred_check
      _
    $region3: #{tpu_custom_call.1} parent=1 // pred_check_branch
      %10 = sbr.rel (0) target = $region5
    $region4: #{tpu_custom_call.1} parent=1 // pred_region
      _
    $region5: #{tpu_custom_call.1} parent=1 // pred_fallthru
      _
    // Predicated region
    $region6: #{tpu_custom_call.1} parent=1 // pred_check
      _
    $region7: #{tpu_custom_call.1} parent=1 // pred_check_branch
      %12 = sbr.rel (0) target = $region9
    $region8: #{tpu_custom_call.1} parent=1 // pred_region
      _
    $region9: #{tpu_custom_call.1} parent=1 // pred_fallthru
      _
    // Predicated region
    $region10: #{tpu_custom_call.1} parent=1 // pred_check
      _
    $region11: #{tpu_custom_call.1} parent=1 // pred_check_branch
      %14 = sbr.rel (0) target = $region13
    $region12: #{tpu_custom_call.1} parent=1 // pred_region
      _
    $region13: #{tpu_custom_call.1} parent=1 // pred_fallthru
      _
    %v15 = vld [vmem:[%s0] sm:$0xff]
    %v16 = vld [vmem:[%s1] sm:$0xff]
    %v17 = vld [vmem:[%s1 + $0x8] sm:$0xff]
    %v18 = vld [vmem:[%s1 + $0x10] sm:$0xff]
    %v19 = vld [vmem:[%s1 + $0x18] sm:$0xff]
    %v20 = vld [vmem:[%s2] sm:$0x1]
    %v22 = vperm.slane %v20, 0
    %vm24 = vcmask 261120
    %v26 = vsel %vm24, %v15, 0
    %28 = vmatpush.msra.mxu0 0.0
    %29 = vmatpush.msra.mxu0 0.0
    %30 = vmatpush.msra.mxu0 0.0
    %31 = vmatpush.msra.mxu0 0.0
    %32 = vmatpush.msra.mxu0 0.0
    %33 = vmatpush.msra.mxu0 0.0
    %34 = vmatpush.msra.mxu0 0.0
    %35 = vmatpush.msra.mxu0 0.0
    %36 = vmatpush.msra.mxu0 0.0
    %37 = vmatpush.msra.mxu0 0.0
    %38 = vmatpush.msra.mxu0 0.0
    %39 = vmatpush.msra.mxu0 0.0
    %40 = vmatpush.msra.mxu0 %v19
    %41 = vmatpush.msra.mxu0 %v18
    %42 = vmatpush.msra.mxu0 %v17
    %43 = vmatpush.msra.mxu0 %v16
    %44 = vmatmul.f32.gmra.mxu0 %v26
    %v45 = vpop.f32.mrf.mxu0
    %v46 = vadd.f32 %v22, %v45
    %47 = vdwg.mxu0
    %vm48 = vcmask 80896
    %49 = vst.msk [vmem:[#allocation2] sm:$0xff] %vm48, %v46
    // Predicated region
    $region14: #{tpu_custom_call.1} parent=1 // pred_check
      _
    $region15: #{tpu_custom_call.1} parent=1 // pred_check_branch
      %51 = sbr.rel (0) target = $region17
    $region16: #{tpu_custom_call.1} parent=1 // pred_region
      %53 = vsyncadd [#allocation3], 0
      %s55 = sshll.u32 [#allocation2], 4
      %s56 = int_to_ptr.vmem [resolvable:$true] %s55
      %s57 = sshll.u32 %s3, 4
      %s58 = int_to_ptr.hbm [resolvable:$true] %s57
      %60 = dma.vmem_to_hbm [thread:$0]  %s56, 128, %s58, [#allocation3]
    $region17: #{tpu_custom_call.1} parent=1 // pred_fallthru
      _
    // Predicated region
    $region18: #{tpu_custom_call.1} parent=1 // pred_check
      _
    $region19: #{tpu_custom_call.1} parent=1 // pred_check_branch
      %62 = sbr.rel (0) target = $region21
    $region20: #{tpu_custom_call.1} parent=1 // pred_region
      %64 = dma.done [#allocation3], 128
    $region21: #{tpu_custom_call.1} parent=1 // pred_fallthru
      _
    %65 = vsyncpa [#allocation3], 1

</llo_original>
